<compile_context>
chip_gen: v7x
topology: tpu7x:2x2x1
jax: 0.10.0
libtpu: 0.0.40
codegen_flags: <defaults>
</compile_context>

<pallas_src>
import math

import jax
import jax.numpy as jnp
from jax import lax
from jax.experimental import pallas as pl
from jax.experimental.pallas import tpu as pltpu


def cond_gen_kernel(xf_ref, qf_ref, w1pt_ref, b1pt_ref, w2t_ref, invf_ref, phase_ref,
                    out_ref):
    """One grid step = a block of `tb` batch rows.

    xf_ref, qf_ref : SMEM (B*F,)            flattened features / quantiles (scalar reads)
    w1pt_ref       : VMEM (H, n_cond)       w2[:, :H] @ w1.T        (folded, transposed)
    b1pt_ref       : VMEM (H, n_cond)       w2[:, :H] @ b1.T + b2   (folded, transposed)
    w2t_ref        : VMEM (H, H)            stats half of Linear(2H -> H)
    invf_ref       : VMEM (1, H)            inv_freq repeated twice along H
    phase_ref      : VMEM (1, H)            [0, pi/2, 0, pi/2, ...]
    out_ref        : VMEM (tb, F, H, n_cond) lane-dense output block
    """
    i = pl.program_id(0)
    tb, Fn, H, C = out_ref.shape
    B_total = xf_ref.shape[0] // Fn

    # Loop-invariant resident constants (hoisted out of the per-row loop).
    w1pt = w1pt_ref[...]      # (H, C)
    b1pt = b1pt_ref[...]      # (H, C)
    w2t = w2t_ref[...]        # (H, H)
    invf = invf_ref[...]      # (1, H)
    phase = phase_ref[...]    # (1, H)

    def row(lb, carry):
        # Clamp keeps the ragged last block's SMEM reads in bounds; the
        # corresponding output rows are discarded by the ragged output block.
        b = jnp.minimum(i * tb + lb, B_total - 1)
        base = b * Fn
        # F is small & static -> unrolled; each feature is exactly one
        # (H, C) = (8, 128) vreg, so every store is a full unmasked vst.
        for f in range(Fn):
            x_f = xf_ref[base + f]                            # scalar reads from SMEM
            q_f = qf_ref[base + f]
            s = jnp.sin(q_f * invf + phase)                   # (1, H) sin/cos interleave
            sp = jnp.sum(w2t * s, axis=-1, keepdims=True)     # (H, 1) stats projection
            out = x_f * w1pt + (b1pt + sp)                    # (H, C) lane-dense slab
            out_ref[lb, f] = out.astype(out_ref.dtype)
        return carry

    # Unrolled row loop: hides the tiny per-row sin -> reduce dependency chain and
    # keeps the store pipeline (the real binder) busy.
    lax.fori_loop(0, tb, row, 0, unroll=min(8, max(tb, 1)))


def _block_budget_bytes():
    """Per-generation (output-block bytes, vmem_limit_bytes) for the pipeline."""
    try:
        kind = jax.devices()[0].device_kind.lower()
    except Exception:
        kind = ""
    if "v5" in kind:
        # v5e: most write-bound (~820 GB/s), default scoped VMEM is 16 MiB -> raise it.
        return 8 << 20, 24 << 20
    if "v6" in kind:
        # v6e: 128 MiB VMEM; big blocks amortize per-step pipeline overhead.
        return 16 << 20, 40 << 20
    if "7" in kind:
        # v7x: 64 MiB physical VMEM, 3.2 TB/s HBM.
        return 10 << 20, 32 << 20
    return 8 << 20, 32 << 20   # unknown generation: conservative defaults


def condition_generation_forward(x, quantile, w1, b1, w2, b2, inv_freq, *,
                                 lane_dense_output=False):
    """x, quantile: (B, F) float32.

    Returns (B, n_cond, F, n_hidden) float32 (module layout), or the kernel's
    lane-dense (B, F, n_hidden, n_cond) layout if lane_dense_output=True (preferred
    handoff for downstream kernels -- skips the HBM-traffic-tripling transpose).

    w1, b1   : (n_cond, H)  Linear(1, n_cond*H) weight column / bias, reshaped
    w2       : (H, 2H)      Linear(2H, H) weight, PyTorch (out, in) layout
    b2       : (H,)         its bias
    inv_freq : (H//2,)      SinusoidalEmbedding buffer
    """
    B, Fn = x.shape
    n_cond, H = w1.shape
    hp = lax.Precision.HIGHEST

    w2s = w2[:, :H]          # sample half   (H_out, H_in)
    w2t = w2[:, H:]          # stats  half   (H_out, H_in)

    # Fold Linear(1 -> n_cond*H) through the sample half of Linear(2H -> H),
    # directly in the transposed (H, n_cond) lane-dense layout.
    w1pt = jnp.einsum("oh,ch->oc", w2s, w1, precision=hp)                  # (H, n_cond)
    b1pt = jnp.einsum("oh,ch->oc", w2s, b1, precision=hp) + b2[:, None]    # (H, n_cond)

    # Sinusoidal embedding as a single sin():  emb[k] = sin(q * invf_rep[k] + phase[k]).
    invf_rep = jnp.repeat(inv_freq, 2).reshape(1, H).astype(jnp.float32)
    phase = jnp.tile(jnp.array([0.0, math.pi / 2.0], jnp.float32), H // 2).reshape(1, H)

    # Scalars flattened to 1-D: SMEM pads a 1-D array only to next_pow2(4*B*F) bytes
    # (the 2-D (B, F) layout would pad to [B, 128] words and can starve/overflow SMEM).
    xf = x.reshape(B * Fn).astype(jnp.float32)
    qf = quantile.reshape(B * Fn).astype(jnp.float32)

    # Batch rows per grid step: per-generation budget to amortize the ~0.35us/step
    # pipeline overhead while keeping 2x-buffered output inside the scoped VMEM limit.
    row_bytes = Fn * H * n_cond * 4
    blk_bytes, vmem_limit = _block_budget_bytes()
    tb = int(max(1, min(B, blk_bytes // row_bytes)))
    # Keep at least 2 grid steps when B >= 2 so both v7x TensorCores get work
    # (grid is the only sharding axis) and the pipeline has something to overlap.
    tb = int(min(tb, max(1, -(-B // 2))))
    num_blocks = pl.cdiv(B, tb)

    out_bfhc = pl.pallas_call(
        cond_gen_kernel,
        out_shape=jax.ShapeDtypeStruct((B, Fn, H, n_cond), jnp.float32),
        grid=(num_blocks,),
        in_specs=[
            pl.BlockSpec(memory_space=pltpu.MemorySpace.SMEM),   # x flat     (scalars)
            pl.BlockSpec(memory_space=pltpu.MemorySpace.SMEM),   # quantile   (scalars)
            pl.BlockSpec((H, n_cond), lambda i: (0, 0)),         # folded weight (resident)
            pl.BlockSpec((H, n_cond), lambda i: (0, 0)),         # folded bias   (resident)
            pl.BlockSpec((H, H), lambda i: (0, 0)),              # stats-half weight
            pl.BlockSpec((1, H), lambda i: (0, 0)),              # inv_freq (repeated)
            pl.BlockSpec((1, H), lambda i: (0, 0)),              # sin phase offsets
        ],
        out_specs=pl.BlockSpec((tb, Fn, H, n_cond), lambda i: (i, 0, 0, 0)),
        compiler_params=pltpu.CompilerParams(
            dimension_semantics=("parallel",),
            vmem_limit_bytes=vmem_limit),
    )(xf, qf, w1pt, b1pt, w2t, invf_rep, phase)

    if lane_dense_output:
        # Preferred handoff: downstream DOFEN stages should index this layout
        # directly and avoid re-reading/re-writing the whole tensor.
        return out_bfhc

    # Module semantics: M.permute(0, 2, 1, 3) of the PyTorch forward.  The kernel
    # emits the lane-dense (B, F, H, n_cond) layout, so this is pure layout glue.
    return jnp.transpose(out_bfhc, (0, 3, 1, 2))


def reference_forward(x, quantile, w1, b1, w2, b2, inv_freq):
    """Pure-JAX mirror of the PyTorch forward (numerical branch, unfused)."""
    B, Fn = x.shape
    n_cond, H = w1.shape
    # Linear(1, n_cond*H)
    sample = x[:, :, None, None] * w1[None, None] + b1[None, None]        # (B, F, n_cond, H)
    # SinusoidalEmbedding
    angle = quantile[:, :, None] * inv_freq[None, None, :]                # (B, F, H//2)
    emb = jnp.zeros((B, Fn, H), jnp.float32)
    emb = emb.at[..., 0::2].set(jnp.sin(angle))
    emb = emb.at[..., 1::2].set(jnp.cos(angle))
    stats = jnp.broadcast_to(emb[:, :, None, :], sample.shape)            # (B, F, n_cond, H)
    # Linear(2H -> H) on the concat
    cat = jnp.concatenate([sample, stats], axis=-1)                       # (B, F, n_cond, 2H)
    out = jnp.einsum("bfck,hk->bfch", cat, w2,
                     precision=lax.Precision.HIGHEST) + b2[None, None, None, :]
    return jnp.transpose(out, (0, 2, 1, 3))                               # (B, n_cond, F, H)


if __name__ == "__main__":
    # Module config: category_column_count = [-1, -1, -1, -1]  (all numerical),
    # n_cond=128, n_hidden=8, use_quantile_emb=True.
    B = 2
    F_num = 4
    n_cond = 128
    n_hidden = 8  # d_model of the sinusoidal embedding (must be even)

    key = jax.random.PRNGKey(0)
    kx, kq, kw1, kb1, kw2, kb2 = jax.random.split(key, 6)

    x = jax.random.normal(kx, (B, F_num), jnp.float32)
    quantile = jax.random.uniform(kq, (B, F_num), jnp.float32)        # values in [0, 1]

    # phi_1['num'] = Linear(1, n_cond * n_hidden): weight (n_cond*H, 1) -> (n_cond, H)
    w1 = jax.random.uniform(kw1, (n_cond, n_hidden), jnp.float32, -1.0, 1.0)
    b1 = jax.random.uniform(kb1, (n_cond, n_hidden), jnp.float32, -1.0, 1.0)
    # phi_1['num_comb'] = Linear(2*n_hidden, n_hidden): weight (H, 2H), bias (H,)
    bound = 1.0 / math.sqrt(2 * n_hidden)
    w2 = jax.random.uniform(kw2, (n_hidden, 2 * n_hidden), jnp.float32, -bound, bound)
    b2 = jax.random.uniform(kb2, (n_hidden,), jnp.float32, -bound, bound)

    # SinusoidalEmbedding buffer: inv_freq = exp(arange(0, H, 2) * (-ln(1000)/H))
    inv_freq = jnp.exp(
        jnp.arange(0, n_hidden, 2, dtype=jnp.float32) * (-math.log(1000.0) / n_hidden)
    )                                                                  # (H//2,)

    out = condition_generation_forward(x, quantile, w1, b1, w2, b2, inv_freq)
    out = jax.block_until_ready(out)

    ref = reference_forward(x, quantile, w1, b1, w2, b2, inv_freq)
    assert out.shape == (B, n_cond, F_num, n_hidden), out.shape
    max_err = float(jnp.max(jnp.abs(out - ref)))
    assert jnp.allclose(out, ref, atol=1e-4, rtol=1e-4), max_err

    print("KERNEL_OK")
</pallas_src>

<mosaic_0001>
module attributes {stable_mosaic.version = 11 : i64} {
  func.func @cond_gen_kernel(%arg0: i32, %arg1: memref<8xf32, #tpu.memory_space<smem>>, %arg2: memref<8xf32, #tpu.memory_space<smem>>, %arg3: memref<8x128xf32, #tpu.memory_space<vmem>>, %arg4: memref<8x128xf32, #tpu.memory_space<vmem>>, %arg5: memref<8x8xf32, #tpu.memory_space<vmem>>, %arg6: memref<1x8xf32, #tpu.memory_space<vmem>>, %arg7: memref<1x8xf32, #tpu.memory_space<vmem>>, %arg8: memref<1x4x8x128xf32, #tpu.memory_space<vmem>>) attributes {dimension_semantics = [#tpu.dimension_semantics<parallel>], iteration_bounds = array<i64: 2>, scalar_prefetch = 0 : i64, scratch_operands = 0 : i64, tpu.core_type = #tpu.core_type<tc>, window_params = [{transform_indices = @transform_0, window_bounds = array<i64: 8>}, {transform_indices = @transform_1, window_bounds = array<i64: 8>}, {pipeline_mode = #tpu.pipeline_mode<synchronous>, transform_indices = @transform_2, window_bounds = array<i64: 8, 128>}, {pipeline_mode = #tpu.pipeline_mode<synchronous>, transform_indices = @transform_3, window_bounds = array<i64: 8, 128>}, {pipeline_mode = #tpu.pipeline_mode<synchronous>, transform_indices = @transform_4, window_bounds = array<i64: 8, 8>}, {pipeline_mode = #tpu.pipeline_mode<synchronous>, transform_indices = @transform_5, window_bounds = array<i64: 1, 8>}, {pipeline_mode = #tpu.pipeline_mode<synchronous>, transform_indices = @transform_6, window_bounds = array<i64: 1, 8>}, {transform_indices = @transform_7, window_bounds = array<i64: 1, 4, 8, 128>}]} {
    %c0 = arith.constant 0 : index
    %c0_0 = arith.constant 0 : index
    %0 = vector.load %arg3[%c0, %c0_0] : memref<8x128xf32, #tpu.memory_space<vmem>>, vector<8x128xf32>
    %c0_1 = arith.constant 0 : index
    %c0_2 = arith.constant 0 : index
    %1 = vector.load %arg4[%c0_1, %c0_2] : memref<8x128xf32, #tpu.memory_space<vmem>>, vector<8x128xf32>
    %c0_3 = arith.constant 0 : index
    %c0_4 = arith.constant 0 : index
    %2 = vector.load %arg5[%c0_3, %c0_4] : memref<8x8xf32, #tpu.memory_space<vmem>>, vector<8x8xf32>
    %c0_5 = arith.constant 0 : index
    %c0_6 = arith.constant 0 : index
    %3 = vector.load %arg6[%c0_5, %c0_6] : memref<1x8xf32, #tpu.memory_space<vmem>>, vector<1x8xf32>
    %c0_7 = arith.constant 0 : index
    %c0_8 = arith.constant 0 : index
    %4 = vector.load %arg7[%c0_7, %c0_8] : memref<1x8xf32, #tpu.memory_space<vmem>>, vector<1x8xf32>
    %c0_i32 = arith.constant 0 : i32
    %c1_i32 = arith.constant 1 : i32
    %5 = arith.muli %arg0, %c1_i32 : i32
    %6 = arith.addi %5, %c0_i32 : i32
    %c1_i32_9 = arith.constant 1 : i32
    %7 = arith.minsi %6, %c1_i32_9 : i32
    %c4_i32 = arith.constant 4 : i32
    %8 = arith.muli %7, %c4_i32 : i32
    %c0_i32_10 = arith.constant 0 : i32
    %9 = arith.addi %8, %c0_i32_10 : i32
    %10 = arith.index_cast %9 : i32 to index
    %11 = memref.load %arg1[%10] : memref<8xf32, #tpu.memory_space<smem>>
    %c0_i32_11 = arith.constant 0 : i32
    %12 = arith.addi %8, %c0_i32_11 : i32
    %13 = arith.index_cast %12 : i32 to index
    %14 = memref.load %arg2[%13] : memref<8xf32, #tpu.memory_space<smem>>
    %15 = vector.broadcast %14 : f32 to vector<1x8xf32>
    %16 = arith.mulf %15, %3 : vector<1x8xf32>
    %17 = arith.addf %16, %4 : vector<1x8xf32>
    %18 = math.sin %17 : vector<1x8xf32>
    %19 = vector.broadcast %18 : vector<1x8xf32> to vector<8x8xf32>
    %20 = arith.mulf %2, %19 : vector<8x8xf32>
    %cst = arith.constant dense<0.000000e+00> : vector<8xf32>
    %21 = vector.multi_reduction <add>, %20, %cst [1] : vector<8x8xf32> to vector<8xf32>
    %22 = vector.shape_cast %21 : vector<8xf32> to vector<8x1xf32>
    %23 = vector.broadcast %11 : f32 to vector<8x128xf32>
    %24 = arith.mulf %23, %0 : vector<8x128xf32>
    %25 = vector.broadcast %22 : vector<8x1xf32> to vector<8x128xf32>
    %26 = arith.addf %1, %25 : vector<8x128xf32>
    %27 = arith.addf %24, %26 : vector<8x128xf32>
    %28 = arith.index_cast %c0_i32 : i32 to index
    %c0_12 = arith.constant 0 : index
    %c0_13 = arith.constant 0 : index
    %c0_14 = arith.constant 0 : index
    %29 = vector.load %arg8[%28, %c0_12, %c0_13, %c0_14] : memref<1x4x8x128xf32, #tpu.memory_space<vmem>>, vector<1x1x8x128xf32>
    %30 = vector.shape_cast %29 : vector<1x1x8x128xf32> to vector<8x128xf32>
    %31 = vector.shape_cast %27 : vector<8x128xf32> to vector<1x1x8x128xf32>
    tpu.vector_store %arg8[%28, %c0_12, %c0_13, %c0_14], %31 {strides = array<i32>} : memref<1x4x8x128xf32, #tpu.memory_space<vmem>>, vector<1x1x8x128xf32>,
    %c1_i32_15 = arith.constant 1 : i32
    %32 = arith.addi %8, %c1_i32_15 : i32
    %33 = arith.index_cast %32 : i32 to index
    %34 = memref.load %arg1[%33] : memref<8xf32, #tpu.memory_space<smem>>
    %c1_i32_16 = arith.constant 1 : i32
    %35 = arith.addi %8, %c1_i32_16 : i32
    %36 = arith.index_cast %35 : i32 to index
    %37 = memref.load %arg2[%36] : memref<8xf32, #tpu.memory_space<smem>>
    %38 = vector.broadcast %37 : f32 to vector<1x8xf32>
    %39 = arith.mulf %38, %3 : vector<1x8xf32>
    %40 = arith.addf %39, %4 : vector<1x8xf32>
    %41 = math.sin %40 : vector<1x8xf32>
    %42 = vector.broadcast %41 : vector<1x8xf32> to vector<8x8xf32>
    %43 = arith.mulf %2, %42 : vector<8x8xf32>
    %cst_17 = arith.constant dense<0.000000e+00> : vector<8xf32>
    %44 = vector.multi_reduction <add>, %43, %cst_17 [1] : vector<8x8xf32> to vector<8xf32>
    %45 = vector.shape_cast %44 : vector<8xf32> to vector<8x1xf32>
    %46 = vector.broadcast %34 : f32 to vector<8x128xf32>
    %47 = arith.mulf %46, %0 : vector<8x128xf32>
    %48 = vector.broadcast %45 : vector<8x1xf32> to vector<8x128xf32>
    %49 = arith.addf %1, %48 : vector<8x128xf32>
    %50 = arith.addf %47, %49 : vector<8x128xf32>
    %51 = arith.index_cast %c0_i32 : i32 to index
    %c1 = arith.constant 1 : index
    %c0_18 = arith.constant 0 : index
    %c0_19 = arith.constant 0 : index
    %52 = vector.load %arg8[%51, %c1, %c0_18, %c0_19] : memref<1x4x8x128xf32, #tpu.memory_space<vmem>>, vector<1x1x8x128xf32>
    %53 = vector.shape_cast %52 : vector<1x1x8x128xf32> to vector<8x128xf32>
    %54 = vector.shape_cast %50 : vector<8x128xf32> to vector<1x1x8x128xf32>
    tpu.vector_store %arg8[%51, %c1, %c0_18, %c0_19], %54 {strides = array<i32>} : memref<1x4x8x128xf32, #tpu.memory_space<vmem>>, vector<1x1x8x128xf32>,
    %c2_i32 = arith.constant 2 : i32
    %55 = arith.addi %8, %c2_i32 : i32
    %56 = arith.index_cast %55 : i32 to index
    %57 = memref.load %arg1[%56] : memref<8xf32, #tpu.memory_space<smem>>
    %c2_i32_20 = arith.constant 2 : i32
    %58 = arith.addi %8, %c2_i32_20 : i32
    %59 = arith.index_cast %58 : i32 to index
    %60 = memref.load %arg2[%59] : memref<8xf32, #tpu.memory_space<smem>>
    %61 = vector.broadcast %60 : f32 to vector<1x8xf32>
    %62 = arith.mulf %61, %3 : vector<1x8xf32>
    %63 = arith.addf %62, %4 : vector<1x8xf32>
    %64 = math.sin %63 : vector<1x8xf32>
    %65 = vector.broadcast %64 : vector<1x8xf32> to vector<8x8xf32>
    %66 = arith.mulf %2, %65 : vector<8x8xf32>
    %cst_21 = arith.constant dense<0.000000e+00> : vector<8xf32>
    %67 = vector.multi_reduction <add>, %66, %cst_21 [1] : vector<8x8xf32> to vector<8xf32>
    %68 = vector.shape_cast %67 : vector<8xf32> to vector<8x1xf32>
    %69 = vector.broadcast %57 : f32 to vector<8x128xf32>
    %70 = arith.mulf %69, %0 : vector<8x128xf32>
    %71 = vector.broadcast %68 : vector<8x1xf32> to vector<8x128xf32>
    %72 = arith.addf %1, %71 : vector<8x128xf32>
    %73 = arith.addf %70, %72 : vector<8x128xf32>
    %74 = arith.index_cast %c0_i32 : i32 to index
    %c2 = arith.constant 2 : index
    %c0_22 = arith.constant 0 : index
    %c0_23 = arith.constant 0 : index
    %75 = vector.load %arg8[%74, %c2, %c0_22, %c0_23] : memref<1x4x8x128xf32, #tpu.memory_space<vmem>>, vector<1x1x8x128xf32>
    %76 = vector.shape_cast %75 : vector<1x1x8x128xf32> to vector<8x128xf32>
    %77 = vector.shape_cast %73 : vector<8x128xf32> to vector<1x1x8x128xf32>
    tpu.vector_store %arg8[%74, %c2, %c0_22, %c0_23], %77 {strides = array<i32>} : memref<1x4x8x128xf32, #tpu.memory_space<vmem>>, vector<1x1x8x128xf32>,
    %c3_i32 = arith.constant 3 : i32
    %78 = arith.addi %8, %c3_i32 : i32
    %79 = arith.index_cast %78 : i32 to index
    %80 = memref.load %arg1[%79] : memref<8xf32, #tpu.memory_space<smem>>
    %c3_i32_24 = arith.constant 3 : i32
    %81 = arith.addi %8, %c3_i32_24 : i32
    %82 = arith.index_cast %81 : i32 to index
    %83 = memref.load %arg2[%82] : memref<8xf32, #tpu.memory_space<smem>>
    %84 = vector.broadcast %83 : f32 to vector<1x8xf32>
    %85 = arith.mulf %84, %3 : vector<1x8xf32>
    %86 = arith.addf %85, %4 : vector<1x8xf32>
    %87 = math.sin %86 : vector<1x8xf32>
    %88 = vector.broadcast %87 : vector<1x8xf32> to vector<8x8xf32>
    %89 = arith.mulf %2, %88 : vector<8x8xf32>
    %cst_25 = arith.constant dense<0.000000e+00> : vector<8xf32>
    %90 = vector.multi_reduction <add>, %89, %cst_25 [1] : vector<8x8xf32> to vector<8xf32>
    %91 = vector.shape_cast %90 : vector<8xf32> to vector<8x1xf32>
    %92 = vector.broadcast %80 : f32 to vector<8x128xf32>
    %93 = arith.mulf %92, %0 : vector<8x128xf32>
    %94 = vector.broadcast %91 : vector<8x1xf32> to vector<8x128xf32>
    %95 = arith.addf %1, %94 : vector<8x128xf32>
    %96 = arith.addf %93, %95 : vector<8x128xf32>
    %97 = arith.index_cast %c0_i32 : i32 to index
    %c3 = arith.constant 3 : index
    %c0_26 = arith.constant 0 : index
    %c0_27 = arith.constant 0 : index
    %98 = vector.load %arg8[%97, %c3, %c0_26, %c0_27] : memref<1x4x8x128xf32, #tpu.memory_space<vmem>>, vector<1x1x8x128xf32>
    %99 = vector.shape_cast %98 : vector<1x1x8x128xf32> to vector<8x128xf32>
    %100 = vector.shape_cast %96 : vector<8x128xf32> to vector<1x1x8x128xf32>
    tpu.vector_store %arg8[%97, %c3, %c0_26, %c0_27], %100 {strides = array<i32>} : memref<1x4x8x128xf32, #tpu.memory_space<vmem>>, vector<1x1x8x128xf32>,
    %c1_i32_28 = arith.constant 1 : i32
    return
  }
  func.func @transform_0(%arg0: i32) -> i32 {
    %c0_i32 = arith.constant 0 : i32
    %c0_i32_0 = arith.constant 0 : i32
    return %c0_i32 : i32
  }
  func.func @transform_1(%arg0: i32) -> i32 {
    %c0_i32 = arith.constant 0 : i32
    %c0_i32_0 = arith.constant 0 : i32
    return %c0_i32 : i32
  }
  func.func @transform_2(%arg0: i32) -> (i32, i32) {
    %c0_i32 = arith.constant 0 : i32
    %c0_i32_0 = arith.constant 0 : i32
    %c0_i32_1 = arith.constant 0 : i32
    return %c0_i32, %c0_i32_0 : i32, i32
  }
  func.func @transform_3(%arg0: i32) -> (i32, i32) {
    %c0_i32 = arith.constant 0 : i32
    %c0_i32_0 = arith.constant 0 : i32
    %c0_i32_1 = arith.constant 0 : i32
    return %c0_i32, %c0_i32_0 : i32, i32
  }
  func.func @transform_4(%arg0: i32) -> (i32, i32) {
    %c0_i32 = arith.constant 0 : i32
    %c0_i32_0 = arith.constant 0 : i32
    %c0_i32_1 = arith.constant 0 : i32
    return %c0_i32, %c0_i32_0 : i32, i32
  }
  func.func @transform_5(%arg0: i32) -> (i32, i32) {
    %c0_i32 = arith.constant 0 : i32
    %c0_i32_0 = arith.constant 0 : i32
    %c0_i32_1 = arith.constant 0 : i32
    return %c0_i32, %c0_i32_0 : i32, i32
  }
  func.func @transform_6(%arg0: i32) -> (i32, i32) {
    %c0_i32 = arith.constant 0 : i32
    %c0_i32_0 = arith.constant 0 : i32
    %c0_i32_1 = arith.constant 0 : i32
    return %c0_i32, %c0_i32_0 : i32, i32
  }
  func.func @transform_7(%arg0: i32) -> (i32, i32, i32, i32) {
    %c0_i32 = arith.constant 0 : i32
    %c0_i32_0 = arith.constant 0 : i32
    %c0_i32_1 = arith.constant 0 : i32
    %c0_i32_2 = arith.constant 0 : i32
    return %arg0, %c0_i32, %c0_i32_0, %c0_i32_1 : i32, i32, i32, i32
  }
}

</mosaic_0001>

<llo_original>
// kernel: tpu_custom_call.1
$region0: #{tpu_custom_call.1}
  #allocation0 [shape = 'u32[]', space=smem, size = 0x4, offset = 0x4, fixed_abs, tag = 'smem constant byte address 0x4 - core index']
  #allocation1 [shape = 'u32[144,128]{1,0:T(1,128)}', space=vmem, size = 0x12000, scoped, tag = 'internal scratch']
  %s0 = inlined_call_operand.hbm [shape: f32[8], index: 0, kind: input, shape index: {}]
  %s1 = inlined_call_operand.vmem [shape: f32[8], index: 1, kind: input, shape index: {}]
  %s2 = inlined_call_operand.hbm [shape: f32[8,128], index: 2, kind: input, shape index: {}]
  %s3 = inlined_call_operand.vmem [shape: f32[8,128], index: 3, kind: input, shape index: {}]
  %s4 = inlined_call_operand.hbm [shape: f32[8,8], index: 4, kind: input, shape index: {}]
  %s5 = inlined_call_operand.vmem [shape: f32[1,8], index: 5, kind: input, shape index: {}]
  %s6 = inlined_call_operand.vmem [shape: f32[1,8], index: 6, kind: input, shape index: {}]
  %s7 = inlined_call_operand.hbm [shape: f32[2,4,8,128], index: 7, kind: output, shape index: {}]
  %s8 = sld [smem:[#allocation0]]
  $region77: #{tpu_custom_call.1} parent=0
    _
  %s10 = ssub.s32 1, %s8
  %s11 = scalar_select 0, %s10, %s8
  $region1: #{tpu_custom_call.1} parent=0
    #allocation2 [shape = 'u8[512]{0}', space=smem, size = 0x200, scoped, tag = 'input window, operand 0, single buffered']
    #allocation3 [shape = 's32[2]{0}', space=sflag, size = 0x8, scoped, tag = 'scoped memory for tpu_custom_call.1']
    #allocation4 [shape = 's32[2]{0}', space=sflag, size = 0x8, scoped, tag = 'scoped memory for tpu_custom_call.1']
    #allocation5 [shape = 's32[2]{0}', space=sflag, size = 0x8, scoped, tag = 'scoped memory for tpu_custom_call.1']
    #allocation6 [shape = 's32[2]{0}', space=sflag, size = 0x8, scoped, tag = 'scoped memory for tpu_custom_call.1']
    #allocation7 [shape = 'u8[512]{0}', space=smem, size = 0x200, scoped, tag = 'input window, operand 1, single buffered']
    #allocation8 [shape = 'u8[4096]{0}', space=vmem, size = 0x1000, scoped, tag = 'input window, operand 2, single buffered']
    #allocation9 [shape = 'u8[4096]{0}', space=vmem, size = 0x1000, scoped, tag = 'input window, operand 4, single buffered']
    #allocation10 [shape = 's32[1]{0}', space=sflag, size = 0x4, scoped, tag = 'scoped memory for tpu_custom_call.1']
    #allocation11 [shape = 'u8[32768]{0}', space=vmem, size = 0x8000, scoped, tag = 'output window, operand 0']
    %12 = vsyncpa [#allocation5], 0
    %13 = vsyncpa [#allocation6], 0
    %14 = vsyncpa [#allocation3], 0
    %15 = vsyncpa [#allocation10], 0
    %16 = vsyncpa [#allocation4], 0
    %s17 = scalar_lea.sflag [#allocation4], 1
    %18 = vsyncpa %s17, 0
    loop: start=0, step=1, limit=4
    $region2: #{tpu_custom_call.1} parent=1 // loop_pre_header
      _
    $region3: #{tpu_custom_call.1} parent=1 // loop_header
      %s20 = sphi 0, %s24
      %p21 = scmp.ge.s32.totalorder %s20, 4
      %s28 = sphi 0, %s28
      %s30 = sphi 0, %s28
      %s31 = sphi 0, %s30
      %s45 = sphi 0, %s31
      %s49 = sphi 0, %s49
      %s51 = sphi 0, %s49
      %s52 = sphi 0, %s51
      %s66 = sphi 0, %s52
      %s70 = sphi 0, %s70
      %s72 = sphi 0, %s70
      %s73 = sphi 0, %s72
      %s87 = sphi 0, %s73
      %s91 = sphi 0, %s91
      %s93 = sphi 0, %s91
      %s94 = sphi 0, %s93
      %s108 = sphi 0, %s94
      %s112 = sphi 0, %s112
      %s114 = sphi 0, %s112
      %s115 = sphi 0, %s114
      %s129 = sphi 0, %s115
      %s133 = sphi 0, %s133
      %s135 = sphi 0, %s133
      %s136 = sphi 0, %s135
      %s150 = sphi 0, %s136
      %s154 = sphi 0, %s154
      %s156 = sphi 0, %s154
      %s157 = sphi 0, %s156
      %s171 = sphi 0, %s157
      %s177 = sphi 0, %s179
      %s180 = sphi 0, %s177
      %s181 = sphi 0, %s180
      %s197 = sphi 0, %s181
    $region4: #{tpu_custom_call.1} parent=1 // loop_header_branch
      %23 = sbr.rel (%p21) target = $region8
    $region5: #{tpu_custom_call.1} parent=1 // loop_body
      %s25 = ssub.s32 %s20, 1
      %s26 = ssub.s32 %s20, 2
      %s27 = sadd.s32 %s20, 1
      %s29 = sadd.s32 %s28, 1
      %p32 = scmp.eq.s32.totalorder %s20, 1
      %p33 = scmp.ne.s32.totalorder %s28, %s30
      %p34 = scmp.eq.s32.totalorder %s20, 0
      %p35 = por %p33, %p34
      %p36 = scmp.ne.s32.totalorder %s28, %s30
      %p37 = scmp.eq.s32.totalorder %s25, 1
      %p38 = por %p36, %p37
      %p39 = scmp.ne.s32.totalorder %s30, %s31
      %p40 = scmp.eq.s32.totalorder %s25, 0
      %p41 = por %p39, %p40
      %p42 = scmp.ne.s32.totalorder %s30, %s31
      %p43 = scmp.eq.s32.totalorder %s26, 1
      %p44 = por %p42, %p43
      %p46 = scmp.ne.s32.totalorder %s31, %s45
      %p47 = scmp.eq.s32.totalorder %s26, 0
      %p48 = por %p46, %p47
      %s50 = sadd.s32 %s49, 1
      %p53 = scmp.eq.s32.totalorder %s20, 1
      %p54 = scmp.ne.s32.totalorder %s49, %s51
      %p55 = scmp.eq.s32.totalorder %s20, 0
      %p56 = por %p54, %p55
      %p57 = scmp.ne.s32.totalorder %s49, %s51
      %p58 = scmp.eq.s32.totalorder %s25, 1
      %p59 = por %p57, %p58
      %p60 = scmp.ne.s32.totalorder %s51, %s52
      %p61 = scmp.eq.s32.totalorder %s25, 0
      %p62 = por %p60, %p61
      %p63 = scmp.ne.s32.totalorder %s51, %s52
      %p64 = scmp.eq.s32.totalorder %s26, 1
      %p65 = por %p63, %p64
      %p67 = scmp.ne.s32.totalorder %s52, %s66
      %p68 = scmp.eq.s32.totalorder %s26, 0
      %p69 = por %p67, %p68
      %s71 = sadd.s32 %s70, 1
      %p74 = scmp.eq.s32.totalorder %s20, 1
      %p75 = scmp.ne.s32.totalorder %s70, %s72
      %p76 = scmp.eq.s32.totalorder %s20, 0
      %p77 = por %p75, %p76
      %p78 = scmp.ne.s32.totalorder %s70, %s72
      %p79 = scmp.eq.s32.totalorder %s25, 1
      %p80 = por %p78, %p79
      %p81 = scmp.ne.s32.totalorder %s72, %s73
      %p82 = scmp.eq.s32.totalorder %s25, 0
      %p83 = por %p81, %p82
      %p84 = scmp.ne.s32.totalorder %s72, %s73
      %p85 = scmp.eq.s32.totalorder %s26, 1
      %p86 = por %p84, %p85
      %p88 = scmp.ne.s32.totalorder %s73, %s87
      %p89 = scmp.eq.s32.totalorder %s26, 0
      %p90 = por %p88, %p89
      %s92 = sadd.s32 %s91, 1
      %p95 = scmp.eq.s32.totalorder %s20, 1
      %p96 = scmp.ne.s32.totalorder %s91, %s93
      %p97 = scmp.eq.s32.totalorder %s20, 0
      %p98 = por %p96, %p97
      %p99 = scmp.ne.s32.totalorder %s91, %s93
      %p100 = scmp.eq.s32.totalorder %s25, 1
      %p101 = por %p99, %p100
      %p102 = scmp.ne.s32.totalorder %s93, %s94
      %p103 = scmp.eq.s32.totalorder %s25, 0
      %p104 = por %p102, %p103
      %p105 = scmp.ne.s32.totalorder %s93, %s94
      %p106 = scmp.eq.s32.totalorder %s26, 1
      %p107 = por %p105, %p106
      %p109 = scmp.ne.s32.totalorder %s94, %s108
      %p110 = scmp.eq.s32.totalorder %s26, 0
      %p111 = por %p109, %p110
      %s113 = sadd.s32 %s112, 1
      %p116 = scmp.eq.s32.totalorder %s20, 1
      %p117 = scmp.ne.s32.totalorder %s112, %s114
      %p118 = scmp.eq.s32.totalorder %s20, 0
      %p119 = por %p117, %p118
      %p120 = scmp.ne.s32.totalorder %s112, %s114
      %p121 = scmp.eq.s32.totalorder %s25, 1
      %p122 = por %p120, %p121
      %p123 = scmp.ne.s32.totalorder %s114, %s115
      %p124 = scmp.eq.s32.totalorder %s25, 0
      %p125 = por %p123, %p124
      %p126 = scmp.ne.s32.totalorder %s114, %s115
      %p127 = scmp.eq.s32.totalorder %s26, 1
      %p128 = por %p126, %p127
      %p130 = scmp.ne.s32.totalorder %s115, %s129
      %p131 = scmp.eq.s32.totalorder %s26, 0
      %p132 = por %p130, %p131
      %s134 = sadd.s32 %s133, 1
      %p137 = scmp.eq.s32.totalorder %s20, 1
      %p138 = scmp.ne.s32.totalorder %s133, %s135
      %p139 = scmp.eq.s32.totalorder %s20, 0
      %p140 = por %p138, %p139
      %p141 = scmp.ne.s32.totalorder %s133, %s135
      %p142 = scmp.eq.s32.totalorder %s25, 1
      %p143 = por %p141, %p142
      %p144 = scmp.ne.s32.totalorder %s135, %s136
      %p145 = scmp.eq.s32.totalorder %s25, 0
      %p146 = por %p144, %p145
      %p147 = scmp.ne.s32.totalorder %s135, %s136
      %p148 = scmp.eq.s32.totalorder %s26, 1
      %p149 = por %p147, %p148
      %p151 = scmp.ne.s32.totalorder %s136, %s150
      %p152 = scmp.eq.s32.totalorder %s26, 0
      %p153 = por %p151, %p152
      %s155 = sadd.s32 %s154, 1
      %p158 = scmp.eq.s32.totalorder %s20, 1
      %p159 = scmp.ne.s32.totalorder %s154, %s156
      %p160 = scmp.eq.s32.totalorder %s20, 0
      %p161 = por %p159, %p160
      %p162 = scmp.ne.s32.totalorder %s154, %s156
      %p163 = scmp.eq.s32.totalorder %s25, 1
      %p164 = por %p162, %p163
      %p165 = scmp.ne.s32.totalorder %s156, %s157
      %p166 = scmp.eq.s32.totalorder %s25, 0
      %p167 = por %p165, %p166
      %p168 = scmp.ne.s32.totalorder %s156, %s157
      %p169 = scmp.eq.s32.totalorder %s26, 1
      %p170 = por %p168, %p169
      %p172 = scmp.ne.s32.totalorder %s157, %s171
      %p173 = scmp.eq.s32.totalorder %s26, 0
      %p174 = por %p172, %p173
      %s175 = ssub.s32 %s20, %s27
      %p176 = scmp.eq.s32.totalorder %s175, 0
      %s178 = sadd.s32 %s177, 1
      %s179 = scalar_select %p176, %s177, %s178
      %p182 = pneg %p176
      %p183 = scmp.eq.s32.totalorder %s20, 1
      %p184 = por %p182, %p183
      %p185 = scmp.ne.s32.totalorder %s177, %s180
      %p186 = scmp.eq.s32.totalorder %s20, 0
      %p187 = por %p185, %p186
      %p188 = scmp.ne.s32.totalorder %s177, %s180
      %p189 = scmp.eq.s32.totalorder %s25, 1
      %p190 = por %p188, %p189
      %p191 = scmp.ne.s32.totalorder %s180, %s181
      %p192 = scmp.eq.s32.totalorder %s25, 0
      %p193 = por %p191, %p192
      %p194 = scmp.ne.s32.totalorder %s180, %s181
      %p195 = scmp.eq.s32.totalorder %s26, 1
      %p196 = por %p194, %p195
      %p198 = scmp.ne.s32.totalorder %s181, %s197
      %p199 = scmp.eq.s32.totalorder %s26, 0
      %p200 = por %p198, %p199
      %p201 = scmp.le.s32.totalorder 1, %s20
      %p202 = scmp.lt.s32.totalorder %s20, 3
      %p203 = pnand %p201, %p202
      %p204 = pneg %p203
      // Predicated region
      $region9: #{tpu_custom_call.1} parent=5 // pred_check
        _
      $region10: #{tpu_custom_call.1} parent=5 // pred_check_branch
        %206 = sbr.rel (%p203) target = $region12
      $region11: #{tpu_custom_call.1} parent=5 // pred_region
        %s207 = ssub.s32 %s20, 1
        // Predicated region
        $region13: #{tpu_custom_call.1} parent=11 // pred_check
          %p208 = pneg %p41
        $region14: #{tpu_custom_call.1} parent=11 // pred_check_branch
          %210 = sbr.rel (%p208) target = $region16
        $region15: #{tpu_custom_call.1} parent=11 // pred_region
          %s212 = ssub.s32 16, 16
          %213 = vsyncadd [#allocation5], %s212
          %216 = dma.hbm_to_smem %s0, 16, [#allocation2], [#allocation5]
        $region16: #{tpu_custom_call.1} parent=11 // pred_fallthru
          _
        // Predicated region
        $region17: #{tpu_custom_call.1} parent=11 // pred_check
          %p217 = pneg %p62
        $region18: #{tpu_custom_call.1} parent=11 // pred_check_branch
          %219 = sbr.rel (%p217) target = $region20
        $region19: #{tpu_custom_call.1} parent=11 // pred_region
          %s221 = ssub.s32 16, 16
          %222 = vsyncadd [#allocation6], %s221
          %s224 = sshll.u32 %s1, 4
          %s225 = int_to_ptr.vmem [resolvable:$true] %s224
          %227 = dma.vmem_to_smem %s225, 16, [#allocation7], [#allocation6]
        $region20: #{tpu_custom_call.1} parent=11 // pred_fallthru
          _
        // Predicated region
        $region21: #{tpu_custom_call.1} parent=11 // pred_check
          %p228 = pneg %p83
        $region22: #{tpu_custom_call.1} parent=11 // pred_check_branch
          %230 = sbr.rel (%p228) target = $region24
        $region23: #{tpu_custom_call.1} parent=11 // pred_region
          %s232 = ssub.s32 128, 128
          %233 = vsyncadd [#allocation3], %s232
          %s235 = sshll.u32 [#allocation8], 4
          %s236 = int_to_ptr.vmem [resolvable:$true] %s235
          %238 = dma.hbm_to_vmem [thread:$0]  %s2, 128, %s236, [#allocation3]
        $region24: #{tpu_custom_call.1} parent=11 // pred_fallthru
          _
        // Predicated region
        $region25: #{tpu_custom_call.1} parent=11 // pred_check
          %p239 = pneg %p104
        $region26: #{tpu_custom_call.1} parent=11 // pred_check_branch
          %241 = sbr.rel (%p239) target = $region28
        $region27: #{tpu_custom_call.1} parent=11 // pred_region
          _
        $region28: #{tpu_custom_call.1} parent=11 // pred_fallthru
          _
        // Predicated region
        $region29: #{tpu_custom_call.1} parent=11 // pred_check
          %p242 = pneg %p125
        $region30: #{tpu_custom_call.1} parent=11 // pred_check_branch
          %244 = sbr.rel (%p242) target = $region32
        $region31: #{tpu_custom_call.1} parent=11 // pred_region
          %s246 = ssub.s32 128, 128
          %247 = vsyncadd [#allocation10], %s246
          %s249 = sshll.u32 [#allocation9], 4
          %s250 = int_to_ptr.vmem [resolvable:$true] %s249
          %252 = dma.hbm_to_vmem [thread:$0]  %s4, 128, %s250, [#allocation10]
        $region32: #{tpu_custom_call.1} parent=11 // pred_fallthru
          _
        // Predicated region
        $region33: #{tpu_custom_call.1} parent=11 // pred_check
          %p253 = pneg %p146
        $region34: #{tpu_custom_call.1} parent=11 // pred_check_branch
          %255 = sbr.rel (%p253) target = $region36
        $region35: #{tpu_custom_call.1} parent=11 // pred_region
          _
        $region36: #{tpu_custom_call.1} parent=11 // pred_fallthru
          _
        // Predicated region
        $region37: #{tpu_custom_call.1} parent=11 // pred_check
          %p256 = pneg %p167
        $region38: #{tpu_custom_call.1} parent=11 // pred_check_branch
          %258 = sbr.rel (%p256) target = $region40
        $region39: #{tpu_custom_call.1} parent=11 // pred_region
          _
        $region40: #{tpu_custom_call.1} parent=11 // pred_fallthru
          _
      $region12: #{tpu_custom_call.1} parent=5 // pred_fallthru
        _
      %p259 = scmp.lt.s32.totalorder %s20, 2
      // Predicated region
      $region41: #{tpu_custom_call.1} parent=5 // pred_check
        %p260 = pneg %p259
      $region42: #{tpu_custom_call.1} parent=5 // pred_check_branch
        %262 = sbr.rel (%p260) target = $region44
      $region43: #{tpu_custom_call.1} parent=5 // pred_region
        _
      $region44: #{tpu_custom_call.1} parent=5 // pred_fallthru
        _
      %p263 = scmp.le.s32.totalorder 1, %s20
      %p264 = scmp.lt.s32.totalorder %s20, 3
      %p265 = pnand %p263, %p264
      %p266 = pneg %p265
      // Predicated region
      $region45: #{tpu_custom_call.1} parent=5 // pred_check
        _
      $region46: #{tpu_custom_call.1} parent=5 // pred_check_branch
        %268 = sbr.rel (%p265) target = $region48
      $region47: #{tpu_custom_call.1} parent=5 // pred_region
        %s269 = ssub.s32 %s20, 1
        // Predicated region
        $region49: #{tpu_custom_call.1} parent=47 // pred_check
          %p270 = pneg %p41
        $region50: #{tpu_custom_call.1} parent=47 // pred_check_branch
          %272 = sbr.rel (%p270) target = $region52
        $region51: #{tpu_custom_call.1} parent=47 // pred_region
          %273 = dma.done [#allocation5], 16
        $region52: #{tpu_custom_call.1} parent=47 // pred_fallthru
          _
        // Predicated region
        $region53: #{tpu_custom_call.1} parent=47 // pred_check
          %p274 = pneg %p62
        $region54: #{tpu_custom_call.1} parent=47 // pred_check_branch
          %276 = sbr.rel (%p274) target = $region56
        $region55: #{tpu_custom_call.1} parent=47 // pred_region
          %277 = dma.done [#allocation6], 16
        $region56: #{tpu_custom_call.1} parent=47 // pred_fallthru
          _
        // Predicated region
        $region57: #{tpu_custom_call.1} parent=47 // pred_check
          %p278 = pneg %p83
        $region58: #{tpu_custom_call.1} parent=47 // pred_check_branch
          %280 = sbr.rel (%p278) target = $region60
        $region59: #{tpu_custom_call.1} parent=47 // pred_region
          %281 = dma.done [#allocation3], 128
        $region60: #{tpu_custom_call.1} parent=47 // pred_fallthru
          _
        // Predicated region
        $region61: #{tpu_custom_call.1} parent=47 // pred_check
          %p282 = pneg %p125
        $region62: #{tpu_custom_call.1} parent=47 // pred_check_branch
          %284 = sbr.rel (%p282) target = $region64
        $region63: #{tpu_custom_call.1} parent=47 // pred_region
          %285 = dma.done [#allocation10], 128
        $region64: #{tpu_custom_call.1} parent=47 // pred_fallthru
          _
        %286 = sfence
        %p287 = pneg %p41
        %p288 = pneg %p38
        %p289 = pneg %p62
        %p290 = pneg %p59
        %p291 = pneg %p83
        %p292 = pneg %p80
        %p293 = pneg %p104
        %p294 = pneg %p101
        %p295 = pneg %p125
        %p296 = pneg %p122
        %p297 = pneg %p146
        %p298 = pneg %p143
        %p299 = pneg %p167
        %p300 = pneg %p164
        %p301 = pneg %p193
        %p302 = pneg %p190
        %s303 = sand.u32 %s180, 1
        %s304 = scalar_lea.sflag [#allocation4], %s303
        %s305 = sand.u32 %s180, 1
        %s306 = smul.addr %s305, 32
        %s307 = scalar_lea.vmem [#allocation11], %s306
        %v308 = vld [vmem:[#allocation8] sm:$0xff]
        %v309 = vld [vmem:[%s3] sm:$0xff]
        %v310 = vld [vmem:[#allocation9] sm:$0xff]
        %v311 = vld [vmem:[%s5] sm:$0x1]
        %v312 = vld [vmem:[%s6] sm:$0x1]
        %p313 = scmp.lt.s32.totalorder %s25, 1
        %s314 = scalar_select %p313, %s25, 1
        %s315 = smul.u32 %s314, 4
        %s316 = sld [smem:[#allocation2 + %s315]]
        %s317 = sld [smem:[#allocation7 + %s315]]
        %v318 = vstv %s317
        %v319 = vmul.f32 %v318, %v311
        %v320 = vadd.f32 %v319, %v312
        %v321 = vand.u32 2147483647, %v320
        %vm322 = vcmp.le.f32.partialorder %v321, 0.7853982
        %vm323 = vcmp.lt.s32.totalorder %v320, 0
        %v324 = vand.u32 %v320, 2139095040
        %v325 = vshrl.u32 %v324, 23
        %v326 = vsub.s32 %v325, 127
        %v327 = vand.u32 2147483647, %v320
        %v328 = vand.u32 %v327, 8388607
        %v329 = vor.u32 %v328, 8388608
        %v330 = vsub.s32 0, %v329
        %v331 = vadd.s32 %v326, 1
        %vm332 = vcmp.gt.s32.totalorder %v331, 0
        %v333 = vsel %vm332, %v331, 0
        %v334 = vshrl.u32 %v333, 5
        %v335 = vand.u32 %v333, 31
        %v336 = vsub.s32 32, %v335
        %v337 = vshrl.u32 683565275, %v336
        %v338 = vshll.u32 683565275, %v335
        %v339 = vshrl.u32 2475754826, %v336
        %v340 = vor.u32 %v338, %v339
        %v341 = vshll.u32 2475754826, %v335
        %v342 = vshrl.u32 2131351028, %v336
        %v343 = vor.u32 %v341, %v342
        %v344 = vshll.u32 2131351028, %v335
        %v345 = vshrl.u32 2102212464, %v336
        %v346 = vor.u32 %v344, %v345
        %v347 = vshll.u32 2102212464, %v335
        %v348 = vshrl.u32 920167782, %v336
        %v349 = vor.u32 %v347, %v348
        %v350 = vshll.u32 920167782, %v335
        %v351 = vshrl.u32 1326507024, %v336
        %v352 = vor.u32 %v350, %v351
        %vm353 = vcmp.lt.s32.totalorder %v334, 1
        %vm354 = vcmp.lt.s32.totalorder %v334, 2
        %vm355 = vcmp.lt.s32.totalorder %v334, 3
        %vm356 = vcmp.lt.s32.totalorder %v334, 4
        %v357 = vsel %vm353, %v337, %v340
        %v358 = vsel %vm356, %v346, 2102212464
        %v359 = vsel %vm355, %v343, %v358
        %v360 = vsel %vm354, %v357, %v359
        %v361 = vsel %vm353, %v340, %v343
        %v362 = vsel %vm356, %v349, 920167782
        %v363 = vsel %vm355, %v346, %v362
        %v364 = vsel %vm354, %v361, %v363
        %v365 = vsel %vm353, %v343, %v346
        %v366 = vsel %vm356, %v352, 1326507024
        %v367 = vsel %vm355, %v349, %v366
        %v368 = vsel %vm354, %v365, %v367
        %v369 = vshll.u32 %v329, 8
        %v370 = vmul.u32.u64.compose %v369, %v368
        %v371 = vextract.low.u32 %v370
        %v372 = vextract.high.u32 %v370
        %v373 = vmul.u32.u64.compose %v369, %v364
        %v374 = vextract.low.u32 %v373
        %v375 = vextract.high.u32 %v373
        %v376 = vmul.u32 %v369, %v360
        %v377 = vadd.s32 %v372, %v374
        %vm378 = vc.u32 %v372, %v374
        %v379 = vadd.s32 %v375, 1
        %v380 = vsel %vm378, %v379, %v375
        %v381 = vadd.s32 %v376, %v380
        %v382 = vadd.s32 %v381, 536870912
        %v383 = vshrl.u32 %v382, 30
        %v384 = vshll.u32 %v383, 30
        %v385 = vsub.s32 %v381, %v384
        %vm386 = vcmp.lt.s32.totalorder %v385, 0
        %v387 = vsub.s32 0, %v385
        %v388 = vsel %vm386, %v387, %v385
        %v389 = vclz %v388
        %v390 = vsub.s32 %v389, 2
        %vm391 = vcmp.gt.s32.totalorder 0, %v390
        %v392 = vsel %vm391, 0, %v390
        %v393 = vsub.s32 32, %v392
        %v394 = vshll.u32 %v385, %v392
        %v395 = vshrl.u32 %v377, %v393
        %v396 = vor.u32 %v394, %v395
        %v397 = vsub.s32 4294967266, %v392
        %v398 = vadd.s32 %v397, 127
        %v399 = vshll.u32 %v398, 23
        %v400 = vor.u32 4788187, %v399
        %v401 = vand.u32 2147483647, %v400
        %v403 = vcvt.s32.f32 %v396
        %v404 = vmul.f32 %v403, %v401
        %v405 = vxor.u32 %v404, 2147483648
        %v406 = vsel %vm323, %v405, %v404
        %v407 = vsub.s32 4, %v383
        %v408 = vsel %vm323, %v407, %v383
        %v409 = vsel %vm322, %v320, %v406
        %v410 = vsel %vm322, 0, %v408
        %v411 = vcosq.f32.pop %v409
        %v412 = vsinq.f32.pop %v409
        %vm413 = vweird.f32 %v320
        %v414 = vadd.s32 %v410, 3
        %v415 = vand.u32 %v414, 3
        %vm416 = vcmp.lt.s32.totalorder %v415, 2
        %vm417 = vcmp.eq.s32.totalorder %v415, 0
        %v418 = vxor.u32 %v412, 2147483648
        %v419 = vsel %vm417, %v411, %v418
        %vm420 = vcmp.eq.s32.totalorder %v415, 2
        %v421 = vxor.u32 %v411, 2147483648
        %v422 = vsel %vm420, %v421, %v412
        %v423 = vsel %vm416, %v419, %v422
        %v424 = vsel %vm413, nan, %v423
        %v426 = vlaneseq
        %v427 = vshrl.u32 %v426, 7
        %v428 = vsub.s32 0, %v427
        %v429 = vrot.slane %v424, %v428
        %v431 = vmul.f32 %v310, %v429
        %vm432 = vcmask 64512
        %v433 = vsel %vm432, %v431, 0.0
        %434 = vadd.xlane.f32.xlu0 %v433
        %v435 = vpop.xlane.xlu0 %434
        %v436 = vstv %s316
        %v437 = vmul.f32 %v436, %v308
        %v438 = vadd.f32 %v309, %v435
        %v439 = vadd.f32 %v437, %v438
        %440 = vst [vmem:[%s307] sm:$0xff] %v439
        %s441 = sadd.s32 %s315, 1
        %s442 = sld [smem:[#allocation2 + %s441]]
        %s443 = sld [smem:[#allocation7 + %s441]]
        %v444 = vstv %s443
        %v445 = vmul.f32 %v444, %v311
        %v446 = vadd.f32 %v445, %v312
        %v447 = vand.u32 2147483647, %v446
        %vm448 = vcmp.le.f32.partialorder %v447, 0.7853982
        %vm449 = vcmp.lt.s32.totalorder %v446, 0
        %v450 = vand.u32 %v446, 2139095040
        %v451 = vshrl.u32 %v450, 23
        %v452 = vsub.s32 %v451, 127
        %v453 = vand.u32 2147483647, %v446
        %v454 = vand.u32 %v453, 8388607
        %v455 = vor.u32 %v454, 8388608
        %v456 = vsub.s32 0, %v455
        %v457 = vadd.s32 %v452, 1
        %vm458 = vcmp.gt.s32.totalorder %v457, 0
        %v459 = vsel %vm458, %v457, 0
        %v460 = vshrl.u32 %v459, 5
        %v461 = vand.u32 %v459, 31
        %v462 = vsub.s32 32, %v461
        %v463 = vshrl.u32 683565275, %v462
        %v464 = vshll.u32 683565275, %v461
        %v465 = vshrl.u32 2475754826, %v462
        %v466 = vor.u32 %v464, %v465
        %v467 = vshll.u32 2475754826, %v461
        %v468 = vshrl.u32 2131351028, %v462
        %v469 = vor.u32 %v467, %v468
        %v470 = vshll.u32 2131351028, %v461
        %v471 = vshrl.u32 2102212464, %v462
        %v472 = vor.u32 %v470, %v471
        %v473 = vshll.u32 2102212464, %v461
        %v474 = vshrl.u32 920167782, %v462
        %v475 = vor.u32 %v473, %v474
        %v476 = vshll.u32 920167782, %v461
        %v477 = vshrl.u32 1326507024, %v462
        %v478 = vor.u32 %v476, %v477
        %vm479 = vcmp.lt.s32.totalorder %v460, 1
        %vm480 = vcmp.lt.s32.totalorder %v460, 2
        %vm481 = vcmp.lt.s32.totalorder %v460, 3
        %vm482 = vcmp.lt.s32.totalorder %v460, 4
        %v483 = vsel %vm479, %v463, %v466
        %v484 = vsel %vm482, %v472, 2102212464
        %v485 = vsel %vm481, %v469, %v484
        %v486 = vsel %vm480, %v483, %v485
        %v487 = vsel %vm479, %v466, %v469
        %v488 = vsel %vm482, %v475, 920167782
        %v489 = vsel %vm481, %v472, %v488
        %v490 = vsel %vm480, %v487, %v489
        %v491 = vsel %vm479, %v469, %v472
        %v492 = vsel %vm482, %v478, 1326507024
        %v493 = vsel %vm481, %v475, %v492
        %v494 = vsel %vm480, %v491, %v493
        %v495 = vshll.u32 %v455, 8
        %v496 = vmul.u32.u64.compose %v495, %v494
        %v497 = vextract.low.u32 %v496
        %v498 = vextract.high.u32 %v496
        %v499 = vmul.u32.u64.compose %v495, %v490
        %v500 = vextract.low.u32 %v499
        %v501 = vextract.high.u32 %v499
        %v502 = vmul.u32 %v495, %v486
        %v503 = vadd.s32 %v498, %v500
        %vm504 = vc.u32 %v498, %v500
        %v505 = vadd.s32 %v501, 1
        %v506 = vsel %vm504, %v505, %v501
        %v507 = vadd.s32 %v502, %v506
        %v508 = vadd.s32 %v507, 536870912
        %v509 = vshrl.u32 %v508, 30
        %v510 = vshll.u32 %v509, 30
        %v511 = vsub.s32 %v507, %v510
        %vm512 = vcmp.lt.s32.totalorder %v511, 0
        %v513 = vsub.s32 0, %v511
        %v514 = vsel %vm512, %v513, %v511
        %v515 = vclz %v514
        %v516 = vsub.s32 %v515, 2
        %vm517 = vcmp.gt.s32.totalorder 0, %v516
        %v518 = vsel %vm517, 0, %v516
        %v519 = vsub.s32 32, %v518
        %v520 = vshll.u32 %v511, %v518
        %v521 = vshrl.u32 %v503, %v519
        %v522 = vor.u32 %v520, %v521
        %v523 = vsub.s32 4294967266, %v518
        %v524 = vadd.s32 %v523, 127
        %v525 = vshll.u32 %v524, 23
        %v526 = vor.u32 4788187, %v525
        %v527 = vand.u32 2147483647, %v526
        %v529 = vcvt.s32.f32 %v522
        %v530 = vmul.f32 %v529, %v527
        %v531 = vxor.u32 %v530, 2147483648
        %v532 = vsel %vm449, %v531, %v530
        %v533 = vsub.s32 4, %v509
        %v534 = vsel %vm449, %v533, %v509
        %v535 = vsel %vm448, %v446, %v532
        %v536 = vsel %vm448, 0, %v534
        %v537 = vcosq.f32.pop %v535
        %v538 = vsinq.f32.pop %v535
        %vm539 = vweird.f32 %v446
        %v540 = vadd.s32 %v536, 3
        %v541 = vand.u32 %v540, 3
        %vm542 = vcmp.lt.s32.totalorder %v541, 2
        %vm543 = vcmp.eq.s32.totalorder %v541, 0
        %v544 = vxor.u32 %v538, 2147483648
        %v545 = vsel %vm543, %v537, %v544
        %vm546 = vcmp.eq.s32.totalorder %v541, 2
        %v547 = vxor.u32 %v537, 2147483648
        %v548 = vsel %vm546, %v547, %v538
        %v549 = vsel %vm542, %v545, %v548
        %v550 = vsel %vm539, nan, %v549
        %v552 = vlaneseq
        %v553 = vshrl.u32 %v552, 7
        %v554 = vsub.s32 0, %v553
        %v555 = vrot.slane %v550, %v554
        %v557 = vmul.f32 %v310, %v555
        %v558 = vsel %vm432, %v557, 0.0
        %559 = vadd.xlane.f32.xlu0 %v558
        %v560 = vpop.xlane.xlu0 %559
        %v561 = vstv %s442
        %v562 = vmul.f32 %v561, %v308
        %v563 = vadd.f32 %v309, %v560
        %v564 = vadd.f32 %v562, %v563
        %s565 = scalar_lea.vmem %s307, 8 [#allocation11]
        %566 = vst [vmem:[%s565] sm:$0xff] %v564
        %s567 = sadd.s32 %s315, 2
        %s568 = sld [smem:[#allocation2 + %s567]]
        %s569 = sld [smem:[#allocation7 + %s567]]
        %v570 = vstv %s569
        %v571 = vmul.f32 %v570, %v311
        %v572 = vadd.f32 %v571, %v312
        %v573 = vand.u32 2147483647, %v572
        %vm574 = vcmp.le.f32.partialorder %v573, 0.7853982
        %vm575 = vcmp.lt.s32.totalorder %v572, 0
        %v576 = vand.u32 %v572, 2139095040
        %v577 = vshrl.u32 %v576, 23
        %v578 = vsub.s32 %v577, 127
        %v579 = vand.u32 2147483647, %v572
        %v580 = vand.u32 %v579, 8388607
        %v581 = vor.u32 %v580, 8388608
        %v582 = vsub.s32 0, %v581
        %v583 = vadd.s32 %v578, 1
        %vm584 = vcmp.gt.s32.totalorder %v583, 0
        %v585 = vsel %vm584, %v583, 0
        %v586 = vshrl.u32 %v585, 5
        %v587 = vand.u32 %v585, 31
        %v588 = vsub.s32 32, %v587
        %v589 = vshrl.u32 683565275, %v588
        %v590 = vshll.u32 683565275, %v587
        %v591 = vshrl.u32 2475754826, %v588
        %v592 = vor.u32 %v590, %v591
        %v593 = vshll.u32 2475754826, %v587
        %v594 = vshrl.u32 2131351028, %v588
        %v595 = vor.u32 %v593, %v594
        %v596 = vshll.u32 2131351028, %v587
        %v597 = vshrl.u32 2102212464, %v588
        %v598 = vor.u32 %v596, %v597
        %v599 = vshll.u32 2102212464, %v587
        %v600 = vshrl.u32 920167782, %v588
        %v601 = vor.u32 %v599, %v600
        %v602 = vshll.u32 920167782, %v587
        %v603 = vshrl.u32 1326507024, %v588
        %v604 = vor.u32 %v602, %v603
        %vm605 = vcmp.lt.s32.totalorder %v586, 1
        %vm606 = vcmp.lt.s32.totalorder %v586, 2
        %vm607 = vcmp.lt.s32.totalorder %v586, 3
        %vm608 = vcmp.lt.s32.totalorder %v586, 4
        %v609 = vsel %vm605, %v589, %v592
        %v610 = vsel %vm608, %v598, 2102212464
        %v611 = vsel %vm607, %v595, %v610
        %v612 = vsel %vm606, %v609, %v611
        %v613 = vsel %vm605, %v592, %v595
        %v614 = vsel %vm608, %v601, 920167782
        %v615 = vsel %vm607, %v598, %v614
        %v616 = vsel %vm606, %v613, %v615
        %v617 = vsel %vm605, %v595, %v598
        %v618 = vsel %vm608, %v604, 1326507024
        %v619 = vsel %vm607, %v601, %v618
        %v620 = vsel %vm606, %v617, %v619
        %v621 = vshll.u32 %v581, 8
        %v622 = vmul.u32.u64.compose %v621, %v620
        %v623 = vextract.low.u32 %v622
        %v624 = vextract.high.u32 %v622
        %v625 = vmul.u32.u64.compose %v621, %v616
        %v626 = vextract.low.u32 %v625
        %v627 = vextract.high.u32 %v625
        %v628 = vmul.u32 %v621, %v612
        %v629 = vadd.s32 %v624, %v626
        %vm630 = vc.u32 %v624, %v626
        %v631 = vadd.s32 %v627, 1
        %v632 = vsel %vm630, %v631, %v627
        %v633 = vadd.s32 %v628, %v632
        %v634 = vadd.s32 %v633, 536870912
        %v635 = vshrl.u32 %v634, 30
        %v636 = vshll.u32 %v635, 30
        %v637 = vsub.s32 %v633, %v636
        %vm638 = vcmp.lt.s32.totalorder %v637, 0
        %v639 = vsub.s32 0, %v637
        %v640 = vsel %vm638, %v639, %v637
        %v641 = vclz %v640
        %v642 = vsub.s32 %v641, 2
        %vm643 = vcmp.gt.s32.totalorder 0, %v642
        %v644 = vsel %vm643, 0, %v642
        %v645 = vsub.s32 32, %v644
        %v646 = vshll.u32 %v637, %v644
        %v647 = vshrl.u32 %v629, %v645
        %v648 = vor.u32 %v646, %v647
        %v649 = vsub.s32 4294967266, %v644
        %v650 = vadd.s32 %v649, 127
        %v651 = vshll.u32 %v650, 23
        %v652 = vor.u32 4788187, %v651
        %v653 = vand.u32 2147483647, %v652
        %v655 = vcvt.s32.f32 %v648
        %v656 = vmul.f32 %v655, %v653
        %v657 = vxor.u32 %v656, 2147483648
        %v658 = vsel %vm575, %v657, %v656
        %v659 = vsub.s32 4, %v635
        %v660 = vsel %vm575, %v659, %v635
        %v661 = vsel %vm574, %v572, %v658
        %v662 = vsel %vm574, 0, %v660
        %v663 = vcosq.f32.pop %v661
        %v664 = vsinq.f32.pop %v661
        %vm665 = vweird.f32 %v572
        %v666 = vadd.s32 %v662, 3
        %v667 = vand.u32 %v666, 3
        %vm668 = vcmp.lt.s32.totalorder %v667, 2
        %vm669 = vcmp.eq.s32.totalorder %v667, 0
        %v670 = vxor.u32 %v664, 2147483648
        %v671 = vsel %vm669, %v663, %v670
        %vm672 = vcmp.eq.s32.totalorder %v667, 2
        %v673 = vxor.u32 %v663, 2147483648
        %v674 = vsel %vm672, %v673, %v664
        %v675 = vsel %vm668, %v671, %v674
        %v676 = vsel %vm665, nan, %v675
        %v678 = vlaneseq
        %v679 = vshrl.u32 %v678, 7
        %v680 = vsub.s32 0, %v679
        %v681 = vrot.slane %v676, %v680
        %v683 = vmul.f32 %v310, %v681
        %v684 = vsel %vm432, %v683, 0.0
        %685 = vadd.xlane.f32.xlu0 %v684
        %v686 = vpop.xlane.xlu0 %685
        %v687 = vstv %s568
        %v688 = vmul.f32 %v687, %v308
        %v689 = vadd.f32 %v309, %v686
        %v690 = vadd.f32 %v688, %v689
        %s691 = scalar_lea.vmem %s307, 16 [#allocation11]
        %692 = vst [vmem:[%s691] sm:$0xff] %v690
        %s693 = sadd.s32 %s315, 3
        %s694 = sld [smem:[#allocation2 + %s693]]
        %s695 = sld [smem:[#allocation7 + %s693]]
        %v696 = vstv %s695
        %v697 = vmul.f32 %v696, %v311
        %v698 = vadd.f32 %v697, %v312
        %v699 = vand.u32 2147483647, %v698
        %vm700 = vcmp.le.f32.partialorder %v699, 0.7853982
        %vm701 = vcmp.lt.s32.totalorder %v698, 0
        %v702 = vand.u32 %v698, 2139095040
        %v703 = vshrl.u32 %v702, 23
        %v704 = vsub.s32 %v703, 127
        %v705 = vand.u32 2147483647, %v698
        %v706 = vand.u32 %v705, 8388607
        %v707 = vor.u32 %v706, 8388608
        %v708 = vsub.s32 0, %v707
        %v709 = vadd.s32 %v704, 1
        %vm710 = vcmp.gt.s32.totalorder %v709, 0
        %v711 = vsel %vm710, %v709, 0
        %v712 = vshrl.u32 %v711, 5
        %v713 = vand.u32 %v711, 31
        %v714 = vsub.s32 32, %v713
        %v715 = vshrl.u32 683565275, %v714
        %v716 = vshll.u32 683565275, %v713
        %v717 = vshrl.u32 2475754826, %v714
        %v718 = vor.u32 %v716, %v717
        %v719 = vshll.u32 2475754826, %v713
        %v720 = vshrl.u32 2131351028, %v714
        %v721 = vor.u32 %v719, %v720
        %v722 = vshll.u32 2131351028, %v713
        %v723 = vshrl.u32 2102212464, %v714
        %v724 = vor.u32 %v722, %v723
        %v725 = vshll.u32 2102212464, %v713
        %v726 = vshrl.u32 920167782, %v714
        %v727 = vor.u32 %v725, %v726
        %v728 = vshll.u32 920167782, %v713
        %v729 = vshrl.u32 1326507024, %v714
        %v730 = vor.u32 %v728, %v729
        %vm731 = vcmp.lt.s32.totalorder %v712, 1
        %vm732 = vcmp.lt.s32.totalorder %v712, 2
        %vm733 = vcmp.lt.s32.totalorder %v712, 3
        %vm734 = vcmp.lt.s32.totalorder %v712, 4
        %v735 = vsel %vm731, %v715, %v718
        %v736 = vsel %vm734, %v724, 2102212464
        %v737 = vsel %vm733, %v721, %v736
        %v738 = vsel %vm732, %v735, %v737
        %v739 = vsel %vm731, %v718, %v721
        %v740 = vsel %vm734, %v727, 920167782
        %v741 = vsel %vm733, %v724, %v740
        %v742 = vsel %vm732, %v739, %v741
        %v743 = vsel %vm731, %v721, %v724
        %v744 = vsel %vm734, %v730, 1326507024
        %v745 = vsel %vm733, %v727, %v744
        %v746 = vsel %vm732, %v743, %v745
        %v747 = vshll.u32 %v707, 8
        %v748 = vmul.u32.u64.compose %v747, %v746
        %v749 = vextract.low.u32 %v748
        %v750 = vextract.high.u32 %v748
        %v751 = vmul.u32.u64.compose %v747, %v742
        %v752 = vextract.low.u32 %v751
        %v753 = vextract.high.u32 %v751
        %v754 = vmul.u32 %v747, %v738
        %v755 = vadd.s32 %v750, %v752
        %vm756 = vc.u32 %v750, %v752
        %v757 = vadd.s32 %v753, 1
        %v758 = vsel %vm756, %v757, %v753
        %v759 = vadd.s32 %v754, %v758
        %v760 = vadd.s32 %v759, 536870912
        %v761 = vshrl.u32 %v760, 30
        %v762 = vshll.u32 %v761, 30
        %v763 = vsub.s32 %v759, %v762
        %vm764 = vcmp.lt.s32.totalorder %v763, 0
        %v765 = vsub.s32 0, %v763
        %v766 = vsel %vm764, %v765, %v763
        %v767 = vclz %v766
        %v768 = vsub.s32 %v767, 2
        %vm769 = vcmp.gt.s32.totalorder 0, %v768
        %v770 = vsel %vm769, 0, %v768
        %v771 = vsub.s32 32, %v770
        %v772 = vshll.u32 %v763, %v770
        %v773 = vshrl.u32 %v755, %v771
        %v774 = vor.u32 %v772, %v773
        %v775 = vsub.s32 4294967266, %v770
        %v776 = vadd.s32 %v775, 127
        %v777 = vshll.u32 %v776, 23
        %v778 = vor.u32 4788187, %v777
        %v779 = vand.u32 2147483647, %v778
        %v781 = vcvt.s32.f32 %v774
        %v782 = vmul.f32 %v781, %v779
        %v783 = vxor.u32 %v782, 2147483648
        %v784 = vsel %vm701, %v783, %v782
        %v785 = vsub.s32 4, %v761
        %v786 = vsel %vm701, %v785, %v761
        %v787 = vsel %vm700, %v698, %v784
        %v788 = vsel %vm700, 0, %v786
        %v789 = vcosq.f32.pop %v787
        %v790 = vsinq.f32.pop %v787
        %vm791 = vweird.f32 %v698
        %v792 = vadd.s32 %v788, 3
        %v793 = vand.u32 %v792, 3
        %vm794 = vcmp.lt.s32.totalorder %v793, 2
        %vm795 = vcmp.eq.s32.totalorder %v793, 0
        %v796 = vxor.u32 %v790, 2147483648
        %v797 = vsel %vm795, %v789, %v796
        %vm798 = vcmp.eq.s32.totalorder %v793, 2
        %v799 = vxor.u32 %v789, 2147483648
        %v800 = vsel %vm798, %v799, %v790
        %v801 = vsel %vm794, %v797, %v800
        %v802 = vsel %vm791, nan, %v801
        %v804 = vlaneseq
        %v805 = vshrl.u32 %v804, 7
        %v806 = vsub.s32 0, %v805
        %v807 = vrot.slane %v802, %v806
        %v809 = vmul.f32 %v310, %v807
        %v810 = vsel %vm432, %v809, 0.0
        %811 = vadd.xlane.f32.xlu0 %v810
        %v812 = vpop.xlane.xlu0 %811
        %v813 = vstv %s694
        %v814 = vmul.f32 %v813, %v308
        %v815 = vadd.f32 %v309, %v812
        %v816 = vadd.f32 %v814, %v815
        %s817 = scalar_lea.vmem %s307, 24 [#allocation11]
        %818 = vst [vmem:[%s817] sm:$0xff] %v816
        %s819 = sand.u32 %s180, 1
        %s820 = scalar_lea.sflag [#allocation4], %s819
        %s821 = sand.u32 %s180, 1
        %s822 = smul.addr %s821, 32
        %s823 = scalar_lea.vmem [#allocation11], %s822
        // Predicated region
        $region65: #{tpu_custom_call.1} parent=47 // pred_check
          %p824 = pneg %p190
        $region66: #{tpu_custom_call.1} parent=47 // pred_check_branch
          %826 = sbr.rel (%p824) target = $region68
        $region67: #{tpu_custom_call.1} parent=47 // pred_region
          %s828 = ssub.s32 512, 512
          %829 = vsyncadd %s820, %s828
          %s830 = smul.addr %s25, 4
          %s831 = smul.addr %s830, 128
          %s832 = scalar_lea.hbm %s7, %s831
          %s833 = sshll.u32 %s823, 4
          %s834 = int_to_ptr.vmem [resolvable:$true] %s833
          %839 = dma.vmem_to_hbm [thread:$0]  %s834, 512, %s832, %s820, 128, 128, 8
        $region68: #{tpu_custom_call.1} parent=47 // pred_fallthru
          _
      $region48: #{tpu_custom_call.1} parent=5 // pred_fallthru
        _
      %p840 = scmp.le.s32.totalorder 2, %s20
      // Predicated region
      $region69: #{tpu_custom_call.1} parent=5 // pred_check
        %p841 = pneg %p840
      $region70: #{tpu_custom_call.1} parent=5 // pred_check_branch
        %843 = sbr.rel (%p841) target = $region72
      $region71: #{tpu_custom_call.1} parent=5 // pred_region
        %s844 = ssub.s32 %s20, 2
        // Predicated region
        $region73: #{tpu_custom_call.1} parent=71 // pred_check
          %p845 = pneg %p196
        $region74: #{tpu_custom_call.1} parent=71 // pred_check_branch
          %847 = sbr.rel (%p845) target = $region76
        $region75: #{tpu_custom_call.1} parent=71 // pred_region
          %s848 = sand.u32 %s181, 1
          %s849 = scalar_lea.sflag [#allocation4], %s848
          %s850 = sand.u32 %s181, 1
          %s851 = smul.addr %s850, 32
          %s852 = scalar_lea.vmem [#allocation11], %s851
          %853 = dma.done %s849, 512
        $region76: #{tpu_custom_call.1} parent=71 // pred_fallthru
          _
      $region72: #{tpu_custom_call.1} parent=5 // pred_fallthru
        _
    $region6: #{tpu_custom_call.1} parent=1 // loop_footer
      %s24 = sadd.s32 1, %s20
    $region7: #{tpu_custom_call.1} parent=1 // loop_footer_branch
      %19 = sbr.rel target = $region3
    $region8: #{tpu_custom_call.1} parent=1 // loop_exit
      _
    %854 = vsyncpa [#allocation3], 1
    %s855 = scalar_lea.sflag [#allocation3], 1
    %856 = vsyncpa %s855, 1
    %857 = vsyncpa [#allocation10], 1
    %858 = vsyncpa [#allocation4], 1
    %s859 = scalar_lea.sflag [#allocation4], 1
    %860 = vsyncpa %s859, 1
    %861 = vsyncpa [#allocation5], 1
    %s862 = scalar_lea.sflag [#allocation5], 1
    %863 = vsyncpa %s862, 1
    %864 = vsyncpa [#allocation6], 1
    %s865 = scalar_lea.sflag [#allocation6], 1
    %866 = vsyncpa %s865, 1

</llo_original>
